<compile_context>
chip_gen: v6e
topology: v6e:2x2x1
jax: 0.10.0
libtpu: 0.0.40
codegen_flags: <defaults>
</compile_context>

<pallas_src>
import jax
import jax.numpy as jnp
from jax.experimental import pallas as pl
from jax.experimental.pallas import tpu as pltpu

_LANES = 128                      # lane-dense scalar rows for unmasked stores
_BUF_BUDGET = 8 * 1024 * 1024     # target bytes of double-buffered input DMA per step
_VMEM_LIMIT = 32 * 1024 * 1024    # explicit scoped-VMEM cap (safe on v5e/v6e/v7x)


def _choose_tiles(B, C, H, W, itemsize):
    """Pick (samples per step, channels per step) so DMA buffers fit the budget."""
    plane_bytes = H * W * itemsize

    def buf_bytes(bb, tc):
        # 2 inputs x 2 pipeline buffers x tile
        return 2 * 2 * bb * tc * plane_bytes

    # Largest divisor of C whose single-sample tile fits the budget.
    tC = 1
    for d in range(1, C + 1):
        if C % d == 0 and buf_bytes(1, d) <= _BUF_BUDGET:
            tC = d

    # If a whole sample fits, batch samples per step to amortize the fixed
    # per-step pipeline overhead on small images.  Only proper divisors of B
    # are considered so the batch ("parallel") axis keeps >= 2 blocks.
    bB = 1
    if tC == C and B > 1:
        target_elems = 256 * 1024  # ~1 MiB f32 of input per tile
        for d in range(1, B):
            if B % d == 0 and buf_bytes(d, tC) <= _BUF_BUDGET:
                bB = d
                if d * tC * H * W >= target_elems:
                    break
    return bB, tC


def _tv_mse_kernel(x_ref, t_ref, dh_ref, dw_ref, sse_ref):
    # x_ref, t_ref: (bB, tC, H, W) tile. H and W are always full, so the TV
    # differences need no halo; only the batch and channel axes are tiled.
    x = x_ref[...]
    t = t_ref[...]

    # Native-dtype subtract/abs (bf16-native on v6e/v7x); f32 accumulation.
    d_h = jnp.abs(x[:, :, 1:, :] - x[:, :, :-1, :]).astype(jnp.float32)
    d_w = jnp.abs(x[:, :, :, 1:] - x[:, :, :, :-1]).astype(jnp.float32)
    diff = (x - t).astype(jnp.float32)
    sq = diff * diff

    def _psum(v):
        # Per-sample partial sum: collapse channel + sublane axes first
        # (cheap VPU adds), then the lane axis once.  Result: (bB, 1, 1, 1).
        return jnp.sum(jnp.sum(v, axis=(1, 2), keepdims=True), axis=3,
                       keepdims=True)

    # Lane-dense broadcast stores (128-wide, unmasked).
    dh_ref[...] = jnp.broadcast_to(_psum(d_h), dh_ref.shape)
    dw_ref[...] = jnp.broadcast_to(_psum(d_w), dw_ref.shape)
    sse_ref[...] = jnp.broadcast_to(_psum(sq), sse_ref.shape)


def tv_loss(inputs, targets, tv_lambda):
    """inputs, targets: (B, C, H, W). Returns (B,) loss, matching the torch module."""
    B, C, H, W = inputs.shape
    itemsize = jnp.dtype(inputs.dtype).itemsize
    bB, tC = _choose_tiles(B, C, H, W, itemsize)
    nB, nC = B // bB, C // tC

    part_shape = jax.ShapeDtypeStruct((B, nC, 1, _LANES), jnp.float32)
    out_spec = pl.BlockSpec((bB, 1, 1, _LANES), lambda b, c: (b, c, 0, 0))
    in_spec = pl.BlockSpec((bB, tC, H, W), lambda b, c: (b, c, 0, 0))

    dh_rows, dw_rows, sse_rows = pl.pallas_call(
        _tv_mse_kernel,
        out_shape=(part_shape, part_shape, part_shape),
        grid_spec=pltpu.PrefetchScalarGridSpec(
            num_scalar_prefetch=0,
            grid=(nB, nC),
            in_specs=[in_spec, in_spec],
            out_specs=[out_spec, out_spec, out_spec],
        ),
        compiler_params=pltpu.CompilerParams(
            dimension_semantics=("parallel", "parallel"),
            vmem_limit_bytes=_VMEM_LIMIT,
        ),
        cost_estimate=pl.CostEstimate(
            flops=10 * B * C * H * W,
            transcendentals=0,
            bytes_accessed=2 * B * C * H * W * itemsize,
        ),
    )(inputs, targets)

    # Combine partial sums; divide once by the GLOBAL element counts.
    sum_dh = jnp.sum(dh_rows[:, :, 0, 0], axis=1)     # (B,)
    sum_dw = jnp.sum(dw_rows[:, :, 0, 0], axis=1)     # (B,)
    sse = jnp.sum(sse_rows[:, :, 0, 0])               # scalar

    tv = sum_dh / float(C * (H - 1) * W) + sum_dw / float(C * H * (W - 1))
    mse = sse / float(B * C * H * W)                  # nn.MSELoss(reduction='mean')
    return mse + tv_lambda * tv                       # (B,) via broadcasting


def _tv_loss_ref(inputs, targets, tv_lambda):
    """Pure-JAX reference of the torch module (kornia TV + nn.MSELoss)."""
    x = inputs.astype(jnp.float32)
    t = targets.astype(jnp.float32)
    d_h = jnp.abs(x[:, :, 1:, :] - x[:, :, :-1, :])
    d_w = jnp.abs(x[:, :, :, 1:] - x[:, :, :, :-1])
    tv = jnp.mean(d_h, axis=(1, 2, 3)) + jnp.mean(d_w, axis=(1, 2, 3))  # (B,)
    mse = jnp.mean((x - t) ** 2)
    return mse + tv_lambda * tv


if __name__ == "__main__":
    key = jax.random.PRNGKey(0)
    tv_lambda = 0.1  # deterministic "parameter" from __init__

    # Test 1: small NCHW images (shape implied by the module).
    k1, k2 = jax.random.split(key)
    B, C, H, W = 2, 4, 16, 16
    inputs = jax.random.normal(k1, (B, C, H, W), dtype=jnp.float32)
    targets = jax.random.normal(k2, (B, C, H, W), dtype=jnp.float32)
    out = jax.block_until_ready(tv_loss(inputs, targets, tv_lambda))
    ref = jax.block_until_ready(_tv_loss_ref(inputs, targets, tv_lambda))
    assert out.shape == (B,)
    assert jnp.allclose(out, ref, rtol=1e-5, atol=1e-5), (out, ref)

    # Test 2: exercises multi-sample-per-step batching on a lane-dense shape.
    k3, k4 = jax.random.split(k1)
    B2, C2, H2, W2 = 4, 8, 8, 128
    inputs2 = jax.random.normal(k3, (B2, C2, H2, W2), dtype=jnp.float32)
    targets2 = jax.random.normal(k4, (B2, C2, H2, W2), dtype=jnp.float32)
    out2 = jax.block_until_ready(tv_loss(inputs2, targets2, tv_lambda))
    ref2 = jax.block_until_ready(_tv_loss_ref(inputs2, targets2, tv_lambda))
    assert out2.shape == (B2,)
    assert jnp.allclose(out2, ref2, rtol=1e-5, atol=1e-5), (out2, ref2)

    print("KERNEL_OK")
</pallas_src>

<mosaic_0001>
module attributes {stable_mosaic.version = 11 : i64} {
  func.func @_tv_mse_kernel(%arg0: i32, %arg1: i32, %arg2: memref<1x4x16x16xf32, #tpu.memory_space<vmem>>, %arg3: memref<1x4x16x16xf32, #tpu.memory_space<vmem>>, %arg4: memref<1x1x1x128xf32, #tpu.memory_space<vmem>>, %arg5: memref<1x1x1x128xf32, #tpu.memory_space<vmem>>, %arg6: memref<1x1x1x128xf32, #tpu.memory_space<vmem>>) attributes {dimension_semantics = [#tpu.dimension_semantics<parallel>, #tpu.dimension_semantics<parallel>], iteration_bounds = array<i64: 2, 1>, scalar_prefetch = 0 : i64, scratch_operands = 0 : i64, tpu.core_type = #tpu.core_type<tc>, window_params = [{transform_indices = @transform_0, window_bounds = array<i64: 1, 4, 16, 16>}, {transform_indices = @transform_1, window_bounds = array<i64: 1, 4, 16, 16>}, {transform_indices = @transform_2, window_bounds = array<i64: 1, 1, 1, 128>}, {transform_indices = @transform_3, window_bounds = array<i64: 1, 1, 1, 128>}, {transform_indices = @transform_4, window_bounds = array<i64: 1, 1, 1, 128>}]} {
    %c0 = arith.constant 0 : index
    %c0_0 = arith.constant 0 : index
    %c0_1 = arith.constant 0 : index
    %c0_2 = arith.constant 0 : index
    %0 = vector.load %arg2[%c0, %c0_0, %c0_1, %c0_2] : memref<1x4x16x16xf32, #tpu.memory_space<vmem>>, vector<1x4x16x16xf32>
    %c0_3 = arith.constant 0 : index
    %c0_4 = arith.constant 0 : index
    %c0_5 = arith.constant 0 : index
    %c0_6 = arith.constant 0 : index
    %1 = vector.load %arg3[%c0_3, %c0_4, %c0_5, %c0_6] : memref<1x4x16x16xf32, #tpu.memory_space<vmem>>, vector<1x4x16x16xf32>
    %2 = vector.extract_strided_slice %0 {offsets = [0, 0, 1, 0], sizes = [1, 4, 15, 16], strides = [1, 1, 1, 1]} : vector<1x4x16x16xf32> to vector<1x4x15x16xf32>
    %3 = vector.extract_strided_slice %0 {offsets = [0, 0, 0, 0], sizes = [1, 4, 15, 16], strides = [1, 1, 1, 1]} : vector<1x4x16x16xf32> to vector<1x4x15x16xf32>
    %4 = arith.subf %2, %3 : vector<1x4x15x16xf32>
    %5 = math.absf %4 : vector<1x4x15x16xf32>
    %6 = vector.extract_strided_slice %0 {offsets = [0, 0, 0, 1], sizes = [1, 4, 16, 15], strides = [1, 1, 1, 1]} : vector<1x4x16x16xf32> to vector<1x4x16x15xf32>
    %7 = vector.extract_strided_slice %0 {offsets = [0, 0, 0, 0], sizes = [1, 4, 16, 15], strides = [1, 1, 1, 1]} : vector<1x4x16x16xf32> to vector<1x4x16x15xf32>
    %8 = arith.subf %6, %7 : vector<1x4x16x15xf32>
    %9 = math.absf %8 : vector<1x4x16x15xf32>
    %10 = arith.subf %0, %1 : vector<1x4x16x16xf32>
    %11 = arith.mulf %10, %10 : vector<1x4x16x16xf32>
    %cst = arith.constant dense<0.000000e+00> : vector<1x16xf32>
    %12 = vector.multi_reduction <add>, %5, %cst [1, 2] : vector<1x4x15x16xf32> to vector<1x16xf32>
    %13 = vector.shape_cast %12 : vector<1x16xf32> to vector<1x1x1x16xf32>
    %cst_7 = arith.constant dense<0.000000e+00> : vector<1x1x1xf32>
    %14 = vector.multi_reduction <add>, %13, %cst_7 [3] : vector<1x1x1x16xf32> to vector<1x1x1xf32>
    %15 = vector.shape_cast %14 : vector<1x1x1xf32> to vector<1x1x1x1xf32>
    %16 = vector.shape_cast %15 : vector<1x1x1x1xf32> to vector<1x1x1x1xf32>
    %17 = vector.broadcast %16 : vector<1x1x1x1xf32> to vector<1x1x1x128xf32>
    %c0_8 = arith.constant 0 : index
    %c0_9 = arith.constant 0 : index
    %c0_10 = arith.constant 0 : index
    %c0_11 = arith.constant 0 : index
    %18 = vector.load %arg4[%c0_8, %c0_9, %c0_10, %c0_11] : memref<1x1x1x128xf32, #tpu.memory_space<vmem>>, vector<1x1x1x128xf32>
    tpu.vector_store %arg4[%c0_8, %c0_9, %c0_10, %c0_11], %17 {strides = array<i32>} : memref<1x1x1x128xf32, #tpu.memory_space<vmem>>, vector<1x1x1x128xf32>,
    %cst_12 = arith.constant dense<0.000000e+00> : vector<1x15xf32>
    %19 = vector.multi_reduction <add>, %9, %cst_12 [1, 2] : vector<1x4x16x15xf32> to vector<1x15xf32>
    %20 = vector.shape_cast %19 : vector<1x15xf32> to vector<1x1x1x15xf32>
    %cst_13 = arith.constant dense<0.000000e+00> : vector<1x1x1xf32>
    %21 = vector.multi_reduction <add>, %20, %cst_13 [3] : vector<1x1x1x15xf32> to vector<1x1x1xf32>
    %22 = vector.shape_cast %21 : vector<1x1x1xf32> to vector<1x1x1x1xf32>
    %23 = vector.shape_cast %22 : vector<1x1x1x1xf32> to vector<1x1x1x1xf32>
    %24 = vector.broadcast %23 : vector<1x1x1x1xf32> to vector<1x1x1x128xf32>
    %c0_14 = arith.constant 0 : index
    %c0_15 = arith.constant 0 : index
    %c0_16 = arith.constant 0 : index
    %c0_17 = arith.constant 0 : index
    %25 = vector.load %arg5[%c0_14, %c0_15, %c0_16, %c0_17] : memref<1x1x1x128xf32, #tpu.memory_space<vmem>>, vector<1x1x1x128xf32>
    tpu.vector_store %arg5[%c0_14, %c0_15, %c0_16, %c0_17], %24 {strides = array<i32>} : memref<1x1x1x128xf32, #tpu.memory_space<vmem>>, vector<1x1x1x128xf32>,
    %cst_18 = arith.constant dense<0.000000e+00> : vector<1x16xf32>
    %26 = vector.multi_reduction <add>, %11, %cst_18 [1, 2] : vector<1x4x16x16xf32> to vector<1x16xf32>
    %27 = vector.shape_cast %26 : vector<1x16xf32> to vector<1x1x1x16xf32>
    %cst_19 = arith.constant dense<0.000000e+00> : vector<1x1x1xf32>
    %28 = vector.multi_reduction <add>, %27, %cst_19 [3] : vector<1x1x1x16xf32> to vector<1x1x1xf32>
    %29 = vector.shape_cast %28 : vector<1x1x1xf32> to vector<1x1x1x1xf32>
    %30 = vector.shape_cast %29 : vector<1x1x1x1xf32> to vector<1x1x1x1xf32>
    %31 = vector.broadcast %30 : vector<1x1x1x1xf32> to vector<1x1x1x128xf32>
    %c0_20 = arith.constant 0 : index
    %c0_21 = arith.constant 0 : index
    %c0_22 = arith.constant 0 : index
    %c0_23 = arith.constant 0 : index
    %32 = vector.load %arg6[%c0_20, %c0_21, %c0_22, %c0_23] : memref<1x1x1x128xf32, #tpu.memory_space<vmem>>, vector<1x1x1x128xf32>
    tpu.vector_store %arg6[%c0_20, %c0_21, %c0_22, %c0_23], %31 {strides = array<i32>} : memref<1x1x1x128xf32, #tpu.memory_space<vmem>>, vector<1x1x1x128xf32>,
    return
  }
  func.func @transform_0(%arg0: i32, %arg1: i32) -> (i32, i32, i32, i32) {
    %c0_i32 = arith.constant 0 : i32
    %c0_i32_0 = arith.constant 0 : i32
    %c0_i32_1 = arith.constant 0 : i32
    return %arg0, %arg1, %c0_i32, %c0_i32_0 : i32, i32, i32, i32
  }
  func.func @transform_1(%arg0: i32, %arg1: i32) -> (i32, i32, i32, i32) {
    %c0_i32 = arith.constant 0 : i32
    %c0_i32_0 = arith.constant 0 : i32
    %c0_i32_1 = arith.constant 0 : i32
    return %arg0, %arg1, %c0_i32, %c0_i32_0 : i32, i32, i32, i32
  }
  func.func @transform_2(%arg0: i32, %arg1: i32) -> (i32, i32, i32, i32) {
    %c0_i32 = arith.constant 0 : i32
    %c0_i32_0 = arith.constant 0 : i32
    %c0_i32_1 = arith.constant 0 : i32
    return %arg0, %arg1, %c0_i32, %c0_i32_0 : i32, i32, i32, i32
  }
  func.func @transform_3(%arg0: i32, %arg1: i32) -> (i32, i32, i32, i32) {
    %c0_i32 = arith.constant 0 : i32
    %c0_i32_0 = arith.constant 0 : i32
    %c0_i32_1 = arith.constant 0 : i32
    return %arg0, %arg1, %c0_i32, %c0_i32_0 : i32, i32, i32, i32
  }
  func.func @transform_4(%arg0: i32, %arg1: i32) -> (i32, i32, i32, i32) {
    %c0_i32 = arith.constant 0 : i32
    %c0_i32_0 = arith.constant 0 : i32
    %c0_i32_1 = arith.constant 0 : i32
    return %arg0, %arg1, %c0_i32, %c0_i32_0 : i32, i32, i32, i32
  }
}

</mosaic_0001>

<llo_original>
// kernel: tpu_custom_call.1
$region0: #{tpu_custom_call.1}
  #allocation0 [shape = 'u32[]', space=smem, size = 0x4, offset = 0x4, fixed_abs, tag = 'smem constant byte address 0x4 - core index']
  #allocation1 [shape = 'u32[144,128]{1,0:T(1,128)}', space=vmem, size = 0x12000, scoped, tag = 'internal scratch']
  %s0 = inlined_call_operand.hbm [shape: f32[2,4,16,16], index: 0, kind: input, shape index: {}]
  %s1 = inlined_call_operand.hbm [shape: f32[2,4,16,16], index: 1, kind: input, shape index: {}]
  %s2 = inlined_call_operand.hbm [shape: f32[2,1,1,128], index: 2, kind: output, shape index: {0}]
  %s3 = inlined_call_operand.hbm [shape: f32[2,1,1,128], index: 3, kind: output, shape index: {1}]
  %s4 = inlined_call_operand.hbm [shape: f32[2,1,1,128], index: 4, kind: output, shape index: {2}]
  %5 = xla_tuple %s2, %s3, %s4
  %s6 = sld [smem:[#allocation0]]
  $region65: #{tpu_custom_call.1} parent=0
    _
  %s8 = ssub.s32 1, %s6
  %s9 = scalar_select 0, %s8, %s6
  $region1: #{tpu_custom_call.1} parent=0
    #allocation2 [shape = 'u8[65536]{0}', space=vmem, size = 0x10000, scoped, tag = 'input window, operand 0']
    #allocation3 [shape = 's32[2]{0}', space=sflag, size = 0x8, scoped, tag = 'scoped memory for tpu_custom_call.1']
    #allocation4 [shape = 's32[2]{0}', space=sflag, size = 0x8, scoped, tag = 'scoped memory for tpu_custom_call.1']
    #allocation5 [shape = 'u8[65536]{0}', space=vmem, size = 0x10000, scoped, tag = 'input window, operand 1']
    #allocation6 [shape = 's32[2]{0}', space=sflag, size = 0x8, scoped, tag = 'scoped memory for tpu_custom_call.1']
    #allocation7 [shape = 'u8[1024]{0}', space=vmem, size = 0x400, scoped, tag = 'output window, operand 0']
    #allocation8 [shape = 'u8[1024]{0}', space=vmem, size = 0x400, scoped, tag = 'output window, operand 1']
    #allocation9 [shape = 's32[2]{0}', space=sflag, size = 0x8, scoped, tag = 'scoped memory for tpu_custom_call.1']
    #allocation10 [shape = 'u8[1024]{0}', space=vmem, size = 0x400, scoped, tag = 'output window, operand 2']
    %10 = vsyncpa [#allocation3], 0
    %s11 = scalar_lea.sflag [#allocation3], 1
    %12 = vsyncpa %s11, 0
    %13 = vsyncpa [#allocation6], 0
    %s14 = scalar_lea.sflag [#allocation6], 1
    %15 = vsyncpa %s14, 0
    %16 = vsyncpa [#allocation4], 0
    %s17 = scalar_lea.sflag [#allocation4], 1
    %18 = vsyncpa %s17, 0
    %19 = vsyncpa [#allocation9], 0
    %s20 = scalar_lea.sflag [#allocation9], 1
    %21 = vsyncpa %s20, 0
    loop: start=0, step=1, limit=4
    $region2: #{tpu_custom_call.1} parent=1 // loop_pre_header
      _
    $region3: #{tpu_custom_call.1} parent=1 // loop_header
      %s23 = sphi 0, %s27
      %p24 = scmp.ge.s32.totalorder %s23, 4
      %s30 = sphi 0, %s42
      %s31 = sphi 0, %s38
      %s32 = sphi 0, %s30
      %s33 = sphi 0, %s31
      %s34 = sphi 0, %s32
      %s35 = sphi 0, %s33
      %s47 = sphi 0, %s49
      %s50 = sphi 0, %s47
      %s51 = sphi 0, %s50
      %s67 = sphi 0, %s51
      %s75 = sphi 0, %s77
      %s78 = sphi 0, %s75
      %s79 = sphi 0, %s78
      %s95 = sphi 0, %s79
      %s103 = sphi 0, %s105
      %s106 = sphi 0, %s103
      %s107 = sphi 0, %s106
      %s123 = sphi 0, %s107
      %s131 = sphi 0, %s133
      %s134 = sphi 0, %s131
      %s135 = sphi 0, %s134
      %s151 = sphi 0, %s135
      %s159 = sphi 0, %s161
      %s162 = sphi 0, %s159
      %s163 = sphi 0, %s162
      %s179 = sphi 0, %s163
    $region4: #{tpu_custom_call.1} parent=1 // loop_header_branch
      %26 = sbr.rel (%p24) target = $region8
    $region5: #{tpu_custom_call.1} parent=1 // loop_body
      %s28 = ssub.s32 %s23, 1
      %s29 = ssub.s32 %s23, 2
      %s36 = sadd.s32 1, %s31
      %p37 = scmp.ge.s32.totalorder %s36, 1
      %s38 = scalar_select %p37, 0, %s36
      %s39 = sadd.s32 1, %s30
      %s40 = scalar_select %p37, %s39, %s30
      %p41 = scmp.ge.s32.totalorder %s40, 2
      %s42 = scalar_select %p41, 0, %s40
      %s43 = ssub.s32 %s30, %s42
      %s44 = ssub.s32 %s31, %s38
      %s45 = sor.u32 %s43, %s44
      %p46 = scmp.eq.s32.totalorder %s45, 0
      %s48 = sadd.s32 %s47, 1
      %s49 = scalar_select %p46, %s47, %s48
      %p52 = pneg %p46
      %p53 = scmp.eq.s32.totalorder %s23, 1
      %p54 = por %p52, %p53
      %p55 = scmp.ne.s32.totalorder %s47, %s50
      %p56 = scmp.eq.s32.totalorder %s23, 0
      %p57 = por %p55, %p56
      %p58 = scmp.ne.s32.totalorder %s47, %s50
      %p59 = scmp.eq.s32.totalorder %s28, 1
      %p60 = por %p58, %p59
      %p61 = scmp.ne.s32.totalorder %s50, %s51
      %p62 = scmp.eq.s32.totalorder %s28, 0
      %p63 = por %p61, %p62
      %p64 = scmp.ne.s32.totalorder %s50, %s51
      %p65 = scmp.eq.s32.totalorder %s29, 1
      %p66 = por %p64, %p65
      %p68 = scmp.ne.s32.totalorder %s51, %s67
      %p69 = scmp.eq.s32.totalorder %s29, 0
      %p70 = por %p68, %p69
      %s71 = ssub.s32 %s30, %s42
      %s72 = ssub.s32 %s31, %s38
      %s73 = sor.u32 %s71, %s72
      %p74 = scmp.eq.s32.totalorder %s73, 0
      %s76 = sadd.s32 %s75, 1
      %s77 = scalar_select %p74, %s75, %s76
      %p80 = pneg %p74
      %p81 = scmp.eq.s32.totalorder %s23, 1
      %p82 = por %p80, %p81
      %p83 = scmp.ne.s32.totalorder %s75, %s78
      %p84 = scmp.eq.s32.totalorder %s23, 0
      %p85 = por %p83, %p84
      %p86 = scmp.ne.s32.totalorder %s75, %s78
      %p87 = scmp.eq.s32.totalorder %s28, 1
      %p88 = por %p86, %p87
      %p89 = scmp.ne.s32.totalorder %s78, %s79
      %p90 = scmp.eq.s32.totalorder %s28, 0
      %p91 = por %p89, %p90
      %p92 = scmp.ne.s32.totalorder %s78, %s79
      %p93 = scmp.eq.s32.totalorder %s29, 1
      %p94 = por %p92, %p93
      %p96 = scmp.ne.s32.totalorder %s79, %s95
      %p97 = scmp.eq.s32.totalorder %s29, 0
      %p98 = por %p96, %p97
      %s99 = ssub.s32 %s30, %s42
      %s100 = ssub.s32 %s31, %s38
      %s101 = sor.u32 %s99, %s100
      %p102 = scmp.eq.s32.totalorder %s101, 0
      %s104 = sadd.s32 %s103, 1
      %s105 = scalar_select %p102, %s103, %s104
      %p108 = pneg %p102
      %p109 = scmp.eq.s32.totalorder %s23, 1
      %p110 = por %p108, %p109
      %p111 = scmp.ne.s32.totalorder %s103, %s106
      %p112 = scmp.eq.s32.totalorder %s23, 0
      %p113 = por %p111, %p112
      %p114 = scmp.ne.s32.totalorder %s103, %s106
      %p115 = scmp.eq.s32.totalorder %s28, 1
      %p116 = por %p114, %p115
      %p117 = scmp.ne.s32.totalorder %s106, %s107
      %p118 = scmp.eq.s32.totalorder %s28, 0
      %p119 = por %p117, %p118
      %p120 = scmp.ne.s32.totalorder %s106, %s107
      %p121 = scmp.eq.s32.totalorder %s29, 1
      %p122 = por %p120, %p121
      %p124 = scmp.ne.s32.totalorder %s107, %s123
      %p125 = scmp.eq.s32.totalorder %s29, 0
      %p126 = por %p124, %p125
      %s127 = ssub.s32 %s30, %s42
      %s128 = ssub.s32 %s31, %s38
      %s129 = sor.u32 %s127, %s128
      %p130 = scmp.eq.s32.totalorder %s129, 0
      %s132 = sadd.s32 %s131, 1
      %s133 = scalar_select %p130, %s131, %s132
      %p136 = pneg %p130
      %p137 = scmp.eq.s32.totalorder %s23, 1
      %p138 = por %p136, %p137
      %p139 = scmp.ne.s32.totalorder %s131, %s134
      %p140 = scmp.eq.s32.totalorder %s23, 0
      %p141 = por %p139, %p140
      %p142 = scmp.ne.s32.totalorder %s131, %s134
      %p143 = scmp.eq.s32.totalorder %s28, 1
      %p144 = por %p142, %p143
      %p145 = scmp.ne.s32.totalorder %s134, %s135
      %p146 = scmp.eq.s32.totalorder %s28, 0
      %p147 = por %p145, %p146
      %p148 = scmp.ne.s32.totalorder %s134, %s135
      %p149 = scmp.eq.s32.totalorder %s29, 1
      %p150 = por %p148, %p149
      %p152 = scmp.ne.s32.totalorder %s135, %s151
      %p153 = scmp.eq.s32.totalorder %s29, 0
      %p154 = por %p152, %p153
      %s155 = ssub.s32 %s30, %s42
      %s156 = ssub.s32 %s31, %s38
      %s157 = sor.u32 %s155, %s156
      %p158 = scmp.eq.s32.totalorder %s157, 0
      %s160 = sadd.s32 %s159, 1
      %s161 = scalar_select %p158, %s159, %s160
      %p164 = pneg %p158
      %p165 = scmp.eq.s32.totalorder %s23, 1
      %p166 = por %p164, %p165
      %p167 = scmp.ne.s32.totalorder %s159, %s162
      %p168 = scmp.eq.s32.totalorder %s23, 0
      %p169 = por %p167, %p168
      %p170 = scmp.ne.s32.totalorder %s159, %s162
      %p171 = scmp.eq.s32.totalorder %s28, 1
      %p172 = por %p170, %p171
      %p173 = scmp.ne.s32.totalorder %s162, %s163
      %p174 = scmp.eq.s32.totalorder %s28, 0
      %p175 = por %p173, %p174
      %p176 = scmp.ne.s32.totalorder %s162, %s163
      %p177 = scmp.eq.s32.totalorder %s29, 1
      %p178 = por %p176, %p177
      %p180 = scmp.ne.s32.totalorder %s163, %s179
      %p181 = scmp.eq.s32.totalorder %s29, 0
      %p182 = por %p180, %p181
      %p183 = scmp.le.s32.totalorder 1, %s23
      %p184 = scmp.lt.s32.totalorder %s23, 3
      %p185 = pnand %p183, %p184
      %p186 = pneg %p185
      // Predicated region
      $region9: #{tpu_custom_call.1} parent=5 // pred_check
        _
      $region10: #{tpu_custom_call.1} parent=5 // pred_check_branch
        %188 = sbr.rel (%p185) target = $region12
      $region11: #{tpu_custom_call.1} parent=5 // pred_region
        %s189 = ssub.s32 %s23, 1
      $region12: #{tpu_custom_call.1} parent=5 // pred_fallthru
        _
      %p190 = scmp.lt.s32.totalorder %s23, 2
      // Predicated region
      $region13: #{tpu_custom_call.1} parent=5 // pred_check
        %p191 = pneg %p190
      $region14: #{tpu_custom_call.1} parent=5 // pred_check_branch
        %193 = sbr.rel (%p191) target = $region16
      $region15: #{tpu_custom_call.1} parent=5 // pred_region
        // Predicated region
        $region17: #{tpu_custom_call.1} parent=15 // pred_check
          %p194 = pneg %p57
        $region18: #{tpu_custom_call.1} parent=15 // pred_check_branch
          %196 = sbr.rel (%p194) target = $region20
        $region19: #{tpu_custom_call.1} parent=15 // pred_region
          %s197 = sand.u32 %s47, 1
          %s198 = scalar_lea.sflag [#allocation3], %s197
          %s199 = sand.u32 %s47, 1
          %s200 = smul.addr %s199, 64
          %s201 = scalar_lea.vmem [#allocation2], %s200
          %s202 = smul.u32 4, %s31
          %s204 = ssub.s32 1024, 1024
          %205 = vsyncadd %s198, %s204
          %s206 = smul.addr %s202, 2
          %s207 = smul.addr %s30, 8
          %s208 = sadd.s32 %s206, %s207
          %s209 = smul.addr %s208, 128
          %s210 = scalar_lea.hbm %s0, %s209
          %s211 = sshll.u32 %s201, 4
          %s212 = int_to_ptr.vmem [resolvable:$true] %s211
          %217 = dma.hbm_to_vmem [thread:$0]  %s210, 1024, %s212, %s198, 128, 128, 8
        $region20: #{tpu_custom_call.1} parent=15 // pred_fallthru
          _
        // Predicated region
        $region21: #{tpu_custom_call.1} parent=15 // pred_check
          %p218 = pneg %p85
        $region22: #{tpu_custom_call.1} parent=15 // pred_check_branch
          %220 = sbr.rel (%p218) target = $region24
        $region23: #{tpu_custom_call.1} parent=15 // pred_region
          %s221 = sand.u32 %s75, 1
          %s222 = scalar_lea.sflag [#allocation6], %s221
          %s223 = sand.u32 %s75, 1
          %s224 = smul.addr %s223, 64
          %s225 = scalar_lea.vmem [#allocation5], %s224
          %s226 = smul.u32 4, %s31
          %s228 = ssub.s32 1024, 1024
          %229 = vsyncadd %s222, %s228
          %s230 = smul.addr %s226, 2
          %s231 = smul.addr %s30, 8
          %s232 = sadd.s32 %s230, %s231
          %s233 = smul.addr %s232, 128
          %s234 = scalar_lea.hbm %s1, %s233
          %s235 = sshll.u32 %s225, 4
          %s236 = int_to_ptr.vmem [resolvable:$true] %s235
          %241 = dma.hbm_to_vmem [thread:$0]  %s234, 1024, %s236, %s222, 128, 128, 8
        $region24: #{tpu_custom_call.1} parent=15 // pred_fallthru
          _
      $region16: #{tpu_custom_call.1} parent=5 // pred_fallthru
        _
      %p242 = scmp.le.s32.totalorder 1, %s23
      %p243 = scmp.lt.s32.totalorder %s23, 3
      %p244 = pnand %p242, %p243
      %p245 = pneg %p244
      // Predicated region
      $region25: #{tpu_custom_call.1} parent=5 // pred_check
        _
      $region26: #{tpu_custom_call.1} parent=5 // pred_check_branch
        %247 = sbr.rel (%p244) target = $region28
      $region27: #{tpu_custom_call.1} parent=5 // pred_region
        %s248 = ssub.s32 %s23, 1
        %s249 = sand.u32 %s50, 1
        %s250 = scalar_lea.sflag [#allocation3], %s249
        %s251 = sand.u32 %s50, 1
        %s252 = smul.addr %s251, 64
        %s253 = scalar_lea.vmem [#allocation2], %s252
        // Predicated region
        $region29: #{tpu_custom_call.1} parent=27 // pred_check
          %p254 = pneg %p63
        $region30: #{tpu_custom_call.1} parent=27 // pred_check_branch
          %256 = sbr.rel (%p254) target = $region32
        $region31: #{tpu_custom_call.1} parent=27 // pred_region
          %257 = dma.done %s250, 1024
        $region32: #{tpu_custom_call.1} parent=27 // pred_fallthru
          _
        %s258 = sand.u32 %s78, 1
        %s259 = scalar_lea.sflag [#allocation6], %s258
        %s260 = sand.u32 %s78, 1
        %s261 = smul.addr %s260, 64
        %s262 = scalar_lea.vmem [#allocation5], %s261
        // Predicated region
        $region33: #{tpu_custom_call.1} parent=27 // pred_check
          %p263 = pneg %p91
        $region34: #{tpu_custom_call.1} parent=27 // pred_check_branch
          %265 = sbr.rel (%p263) target = $region36
        $region35: #{tpu_custom_call.1} parent=27 // pred_region
          %266 = dma.done %s259, 1024
        $region36: #{tpu_custom_call.1} parent=27 // pred_fallthru
          _
        %s267 = sand.u32 %s50, 1
        %s268 = scalar_lea.sflag [#allocation3], %s267
        %s269 = sand.u32 %s50, 1
        %s270 = smul.addr %s269, 64
        %s271 = scalar_lea.vmem [#allocation2], %s270
        %p272 = pneg %p63
        %p273 = pneg %p60
        %s274 = sand.u32 %s78, 1
        %s275 = scalar_lea.sflag [#allocation6], %s274
        %s276 = sand.u32 %s78, 1
        %s277 = smul.addr %s276, 64
        %s278 = scalar_lea.vmem [#allocation5], %s277
        %p279 = pneg %p91
        %p280 = pneg %p88
        %p281 = pneg %p119
        %p282 = pneg %p116
        %s283 = sand.u32 %s106, 1
        %s284 = scalar_lea.sflag [#allocation4], %s283
        %s285 = sand.u32 %s106, 1
        %s286 = scalar_lea.vmem [#allocation7], %s285
        %p287 = pneg %p147
        %p288 = pneg %p144
        %s289 = sand.u32 %s28, 1
        %s290 = scalar_lea.sflag [#allocation9], %s289
        %s291 = sand.u32 %s134, 1
        %s292 = scalar_lea.vmem [#allocation8], %s291
        %p293 = pneg %p175
        %p294 = pneg %p172
        %s295 = sand.u32 %s28, 1
        %s296 = scalar_lea.sflag [#allocation9], %s295
        %s297 = sand.u32 %s162, 1
        %s298 = scalar_lea.vmem [#allocation10], %s297
        %s299 = smul.u32 4, %s33
        %s300 = smul.u32 4, %s33
        %v301 = vld [vmem:[%s253] sm:$0xff]
        %v302 = vld [vmem:[%s253 + $0x8] sm:$0xff]
        %v303 = vld [vmem:[%s253 + $0x10] sm:$0xff]
        %v304 = vld [vmem:[%s253 + $0x18] sm:$0xff]
        %v305 = vld [vmem:[%s253 + $0x20] sm:$0xff]
        %v306 = vld [vmem:[%s253 + $0x28] sm:$0xff]
        %v307 = vld [vmem:[%s253 + $0x30] sm:$0xff]
        %v308 = vld [vmem:[%s253 + $0x38] sm:$0xff]
        %v309 = vld [vmem:[%s262] sm:$0xff]
        %v310 = vld [vmem:[%s262 + $0x8] sm:$0xff]
        %v311 = vld [vmem:[%s262 + $0x10] sm:$0xff]
        %v312 = vld [vmem:[%s262 + $0x18] sm:$0xff]
        %v313 = vld [vmem:[%s262 + $0x20] sm:$0xff]
        %v314 = vld [vmem:[%s262 + $0x28] sm:$0xff]
        %v315 = vld [vmem:[%s262 + $0x30] sm:$0xff]
        %v316 = vld [vmem:[%s262 + $0x38] sm:$0xff]
        %vm325 = vcmask 1040384
        %v326 = vrot.slane %v301, 7
        %v327 = vrot.slane %v302, 7
        %v328 = vsel %vm325, %v326, %v327
        %v329 = vrot.slane %v303, 7
        %v330 = vrot.slane %v304, 7
        %v331 = vsel %vm325, %v329, %v330
        %v332 = vrot.slane %v305, 7
        %v333 = vrot.slane %v306, 7
        %v334 = vsel %vm325, %v332, %v333
        %v335 = vrot.slane %v307, 7
        %v336 = vrot.slane %v308, 7
        %v337 = vsel %vm325, %v335, %v336
        %v346 = vsub.f32 %v301, %v326
        %v347 = vsub.f32 %v302, %v328
        %v348 = vsub.f32 %v303, %v329
        %v349 = vsub.f32 %v304, %v331
        %v350 = vsub.f32 %v305, %v332
        %v351 = vsub.f32 %v306, %v334
        %v352 = vsub.f32 %v307, %v335
        %v353 = vsub.f32 %v308, %v337
        %v354 = vand.u32 2147483647, %v346
        %v355 = vand.u32 2147483647, %v347
        %v356 = vand.u32 2147483647, %v348
        %v357 = vand.u32 2147483647, %v349
        %v358 = vand.u32 2147483647, %v350
        %v359 = vand.u32 2147483647, %v351
        %v360 = vand.u32 2147483647, %v352
        %v361 = vand.u32 2147483647, %v353
        %362 = vrot.lane.b32.xlu0 %v301, 1
        %v363 = vpop.permute.xlu0 %362
        %364 = vrot.lane.b32.xlu0 %v302, 1
        %v365 = vpop.permute.xlu0 %364
        %366 = vrot.lane.b32.xlu0 %v303, 1
        %v367 = vpop.permute.xlu0 %366
        %368 = vrot.lane.b32.xlu0 %v304, 1
        %v369 = vpop.permute.xlu0 %368
        %370 = vrot.lane.b32.xlu0 %v305, 1
        %v371 = vpop.permute.xlu0 %370
        %372 = vrot.lane.b32.xlu0 %v306, 1
        %v373 = vpop.permute.xlu0 %372
        %374 = vrot.lane.b32.xlu0 %v307, 1
        %v375 = vpop.permute.xlu0 %374
        %376 = vrot.lane.b32.xlu0 %v308, 1
        %v377 = vpop.permute.xlu0 %376
        %v386 = vsub.f32 %v301, %v363
        %v387 = vsub.f32 %v302, %v365
        %v388 = vsub.f32 %v303, %v367
        %v389 = vsub.f32 %v304, %v369
        %v390 = vsub.f32 %v305, %v371
        %v391 = vsub.f32 %v306, %v373
        %v392 = vsub.f32 %v307, %v375
        %v393 = vsub.f32 %v308, %v377
        %v394 = vand.u32 2147483647, %v386
        %v395 = vand.u32 2147483647, %v387
        %v396 = vand.u32 2147483647, %v388
        %v397 = vand.u32 2147483647, %v389
        %v398 = vand.u32 2147483647, %v390
        %v399 = vand.u32 2147483647, %v391
        %v400 = vand.u32 2147483647, %v392
        %v401 = vand.u32 2147483647, %v393
        %v402 = vsub.f32 %v301, %v309
        %v403 = vsub.f32 %v302, %v310
        %v404 = vsub.f32 %v303, %v311
        %v405 = vsub.f32 %v304, %v312
        %v406 = vsub.f32 %v305, %v313
        %v407 = vsub.f32 %v306, %v314
        %v408 = vsub.f32 %v307, %v315
        %v409 = vsub.f32 %v308, %v316
        %v410 = vmul.f32 %v402, %v402
        %v411 = vmul.f32 %v403, %v403
        %v412 = vmul.f32 %v404, %v404
        %v413 = vmul.f32 %v405, %v405
        %v414 = vmul.f32 %v406, %v406
        %v415 = vmul.f32 %v407, %v407
        %v416 = vmul.f32 %v408, %v408
        %v417 = vmul.f32 %v409, %v409
        %vm426 = vcmask 1046528
        %v427 = vrot.slane %v354, 1
        %v428 = vrot.slane %v355, 1
        %v429 = vsel %vm426, %v427, %v428
        %v430 = vrot.slane %v356, 1
        %v431 = vrot.slane %v357, 1
        %v432 = vsel %vm426, %v430, %v431
        %v433 = vrot.slane %v358, 1
        %v434 = vrot.slane %v359, 1
        %v435 = vsel %vm426, %v433, %v434
        %v436 = vrot.slane %v360, 1
        %v437 = vrot.slane %v361, 1
        %v438 = vsel %vm426, %v436, %v437
        %vm447 = vcmask 130048
        %v448 = vsel %vm447, %v429, 0.0
        %vm449 = vcmask 129024
        %v450 = vsel %vm449, %v428, 0.0
        %v451 = vadd.f32 %v448, %v450
        %v452 = vsel %vm447, %v432, 0.0
        %v453 = vadd.f32 %v451, %v452
        %v454 = vsel %vm449, %v431, 0.0
        %v455 = vadd.f32 %v453, %v454
        %v456 = vsel %vm447, %v435, 0.0
        %v457 = vadd.f32 %v455, %v456
        %v458 = vsel %vm449, %v434, 0.0
        %v459 = vadd.f32 %v457, %v458
        %v460 = vsel %vm447, %v438, 0.0
        %v461 = vadd.f32 %v459, %v460
        %v462 = vsel %vm449, %v437, 0.0
        %v463 = vadd.f32 %v461, %v462
        %v464 = vrot.slane %v463, 4
        %v465 = vadd.f32 %v463, %v464
        %v466 = vrot.slane %v465, 2
        %v467 = vadd.f32 %v465, %v466
        %v468 = vrot.slane %v467, 1
        %v469 = vadd.f32 %v467, %v468
        %v470 = vsel %vm447, %v469, 0.0
        %471 = vadd.xlane.f32.xlu0 %v470
        %v472 = vpop.xlane.xlu0 %471
        %473 = vst [vmem:[%s286] sm:$0x1] %v472
        %vm474 = vcmask 130056
        %v475 = vsel %vm474, %v394, 0.0
        %v476 = vsel %vm474, %v395, 0.0
        %v477 = vadd.f32 %v475, %v476
        %v478 = vsel %vm474, %v396, 0.0
        %v479 = vadd.f32 %v477, %v478
        %v480 = vsel %vm474, %v397, 0.0
        %v481 = vadd.f32 %v479, %v480
        %v482 = vsel %vm474, %v398, 0.0
        %v483 = vadd.f32 %v481, %v482
        %v484 = vsel %vm474, %v399, 0.0
        %v485 = vadd.f32 %v483, %v484
        %v486 = vsel %vm474, %v400, 0.0
        %v487 = vadd.f32 %v485, %v486
        %v488 = vsel %vm474, %v401, 0.0
        %v489 = vadd.f32 %v487, %v488
        %v490 = vrot.slane %v489, 4
        %v491 = vadd.f32 %v489, %v490
        %v492 = vrot.slane %v491, 2
        %v493 = vadd.f32 %v491, %v492
        %v494 = vrot.slane %v493, 1
        %v495 = vadd.f32 %v493, %v494
        %497 = vrot.lane.b32.xlu0 %v495, 127
        %v498 = vpop.permute.xlu0 %497
        %vm500 = vcmask 121856
        %v501 = vsel %vm500, %v498, 0.0
        %502 = vadd.xlane.f32.xlu0 %v501
        %v503 = vpop.xlane.xlu0 %502
        %504 = vst [vmem:[%s292] sm:$0x1] %v503
        %v505 = vsel %vm447, %v410, 0.0
        %v506 = vsel %vm447, %v411, 0.0
        %v507 = vadd.f32 %v505, %v506
        %v508 = vsel %vm447, %v412, 0.0
        %v509 = vadd.f32 %v507, %v508
        %v510 = vsel %vm447, %v413, 0.0
        %v511 = vadd.f32 %v509, %v510
        %v512 = vsel %vm447, %v414, 0.0
        %v513 = vadd.f32 %v511, %v512
        %v514 = vsel %vm447, %v415, 0.0
        %v515 = vadd.f32 %v513, %v514
        %v516 = vsel %vm447, %v416, 0.0
        %v517 = vadd.f32 %v515, %v516
        %v518 = vsel %vm447, %v417, 0.0
        %v519 = vadd.f32 %v517, %v518
        %v520 = vrot.slane %v519, 4
        %v521 = vadd.f32 %v519, %v520
        %v522 = vrot.slane %v521, 2
        %v523 = vadd.f32 %v521, %v522
        %v524 = vrot.slane %v523, 1
        %v525 = vadd.f32 %v523, %v524
        %v526 = vsel %vm447, %v525, 0.0
        %527 = vadd.xlane.f32.xlu0 %v526
        %v528 = vpop.xlane.xlu0 %527
        %529 = vst [vmem:[%s298] sm:$0x1] %v528
        %s530 = sand.u32 %s106, 1
        %s531 = scalar_lea.sflag [#allocation4], %s530
        %s532 = sand.u32 %s106, 1
        %s533 = scalar_lea.vmem [#allocation7], %s532
        %s534 = sand.u32 %s28, 1
        %s535 = scalar_lea.sflag [#allocation9], %s534
        %s536 = sand.u32 %s134, 1
        %s537 = scalar_lea.vmem [#allocation8], %s536
        %s538 = sand.u32 %s28, 1
        %s539 = scalar_lea.sflag [#allocation9], %s538
        %s540 = sand.u32 %s162, 1
        %s541 = scalar_lea.vmem [#allocation10], %s540
        // Predicated region
        $region37: #{tpu_custom_call.1} parent=27 // pred_check
          %p542 = pneg %p116
        $region38: #{tpu_custom_call.1} parent=27 // pred_check_branch
          %544 = sbr.rel (%p542) target = $region40
        $region39: #{tpu_custom_call.1} parent=27 // pred_region
          %s546 = ssub.s32 16, 16
          %547 = vsyncadd %s531, %s546
          %s548 = sadd.s32 %s33, %s32
          %s549 = smul.addr %s548, 16
          %s550 = scalar_lea.hbm %s2, %s549
          %s552 = sshll.u32 %s533, 4
          %s553 = int_to_ptr.vmem [resolvable:$true] %s552
          %555 = dma.vmem_to_hbm [thread:$0]  %s553, 16, %s550, %s531
        $region40: #{tpu_custom_call.1} parent=27 // pred_fallthru
          _
        // Predicated region
        $region41: #{tpu_custom_call.1} parent=27 // pred_check
          %p556 = pneg %p144
        $region42: #{tpu_custom_call.1} parent=27 // pred_check_branch
          %558 = sbr.rel (%p556) target = $region44
        $region43: #{tpu_custom_call.1} parent=27 // pred_region
          %s560 = ssub.s32 16, 16
          %561 = vsyncadd %s535, %s560
          %s562 = sadd.s32 %s33, %s32
          %s563 = smul.addr %s562, 16
          %s564 = scalar_lea.hbm %s3, %s563
          %s566 = sshll.u32 %s537, 4
          %s567 = int_to_ptr.vmem [resolvable:$true] %s566
          %569 = dma.vmem_to_hbm [thread:$0]  %s567, 16, %s564, %s535
        $region44: #{tpu_custom_call.1} parent=27 // pred_fallthru
          _
        // Predicated region
        $region45: #{tpu_custom_call.1} parent=27 // pred_check
          %p570 = pneg %p172
        $region46: #{tpu_custom_call.1} parent=27 // pred_check_branch
          %572 = sbr.rel (%p570) target = $region48
        $region47: #{tpu_custom_call.1} parent=27 // pred_region
          %s574 = ssub.s32 16, 16
          %575 = vsyncadd %s539, %s574
          %s576 = sadd.s32 %s33, %s32
          %s577 = smul.addr %s576, 16
          %s578 = scalar_lea.hbm %s4, %s577
          %s580 = sshll.u32 %s541, 4
          %s581 = int_to_ptr.vmem [resolvable:$true] %s580
          %583 = dma.vmem_to_hbm [thread:$0]  %s581, 16, %s578, %s539
        $region48: #{tpu_custom_call.1} parent=27 // pred_fallthru
          _
      $region28: #{tpu_custom_call.1} parent=5 // pred_fallthru
        _
      %p584 = scmp.le.s32.totalorder 2, %s23
      // Predicated region
      $region49: #{tpu_custom_call.1} parent=5 // pred_check
        %p585 = pneg %p584
      $region50: #{tpu_custom_call.1} parent=5 // pred_check_branch
        %587 = sbr.rel (%p585) target = $region52
      $region51: #{tpu_custom_call.1} parent=5 // pred_region
        %s588 = ssub.s32 %s23, 2
        // Predicated region
        $region53: #{tpu_custom_call.1} parent=51 // pred_check
          %p589 = pneg %p122
        $region54: #{tpu_custom_call.1} parent=51 // pred_check_branch
          %591 = sbr.rel (%p589) target = $region56
        $region55: #{tpu_custom_call.1} parent=51 // pred_region
          %s592 = sand.u32 %s107, 1
          %s593 = scalar_lea.sflag [#allocation4], %s592
          %s594 = sand.u32 %s107, 1
          %s595 = scalar_lea.vmem [#allocation7], %s594
          %596 = dma.done %s593, 16
        $region56: #{tpu_custom_call.1} parent=51 // pred_fallthru
          _
        // Predicated region
        $region57: #{tpu_custom_call.1} parent=51 // pred_check
          %p597 = pneg %p150
        $region58: #{tpu_custom_call.1} parent=51 // pred_check_branch
          %599 = sbr.rel (%p597) target = $region60
        $region59: #{tpu_custom_call.1} parent=51 // pred_region
          %s600 = sand.u32 %s29, 1
          %s601 = scalar_lea.sflag [#allocation9], %s600
          %s602 = sand.u32 %s135, 1
          %s603 = scalar_lea.vmem [#allocation8], %s602
          %604 = dma.done %s601, 16
        $region60: #{tpu_custom_call.1} parent=51 // pred_fallthru
          _
        // Predicated region
        $region61: #{tpu_custom_call.1} parent=51 // pred_check
          %p605 = pneg %p178
        $region62: #{tpu_custom_call.1} parent=51 // pred_check_branch
          %607 = sbr.rel (%p605) target = $region64
        $region63: #{tpu_custom_call.1} parent=51 // pred_region
          %s608 = sand.u32 %s29, 1
          %s609 = scalar_lea.sflag [#allocation9], %s608
          %s610 = sand.u32 %s163, 1
          %s611 = scalar_lea.vmem [#allocation10], %s610
          %612 = dma.done %s609, 16
        $region64: #{tpu_custom_call.1} parent=51 // pred_fallthru
          _
      $region52: #{tpu_custom_call.1} parent=5 // pred_fallthru
        _
    $region6: #{tpu_custom_call.1} parent=1 // loop_footer
      %s27 = sadd.s32 1, %s23
    $region7: #{tpu_custom_call.1} parent=1 // loop_footer_branch
      %22 = sbr.rel target = $region3
    $region8: #{tpu_custom_call.1} parent=1 // loop_exit
      _
    %613 = vsyncpa [#allocation3], 1
    %s614 = scalar_lea.sflag [#allocation3], 1
    %615 = vsyncpa %s614, 1
    %616 = vsyncpa [#allocation6], 1
    %s617 = scalar_lea.sflag [#allocation6], 1
    %618 = vsyncpa %s617, 1
    %619 = vsyncpa [#allocation4], 1
    %s620 = scalar_lea.sflag [#allocation4], 1
    %621 = vsyncpa %s620, 1
    %622 = vsyncpa [#allocation9], 1
    %s623 = scalar_lea.sflag [#allocation9], 1
    %624 = vsyncpa %s623, 1

</llo_original>
